<compile_context>
chip_gen: v6e
topology: v6e:2x2x1
jax: 0.10.0
libtpu: 0.0.40
codegen_flags: <defaults>
</compile_context>

<pallas_src>
import jax
import jax.numpy as jnp
from jax.experimental import pallas as pl
from jax.experimental.pallas import tpu as pltpu


def _copy_kernel(x_ref, o_ref):
    # Whole-tile copy: one lane-dense load + one lane-dense store per grid step.
    o_ref[...] = x_ref[...]


def _pallas_identity(x):
    """Route X through a lane-dense, tiled Pallas identity kernel."""
    orig_shape = x.shape
    n = x.size
    itemsize = jnp.dtype(x.dtype).itemsize

    # Flatten to a lane-dense 2-D slab: last dim = 128 when possible.
    if n % 128 == 0:
        rows, cols = n // 128, 128
    else:
        # Fallback: single full-extent block (legal: block shape == array dims).
        rows, cols = 1, n
    x2 = x.reshape(rows, cols)

    # Sublane granularity by dtype packing: 8 (f32), 16 (bf16), 32 (int8/fp8).
    sublane = max(8, 32 // itemsize)

    # Cap each block at ~4 MiB so in/out double-buffering fits every
    # generation's scoped VMEM default (incl. v7x's smaller 64 MiB VMEM).
    budget_bytes = 4 * 1024 * 1024
    tm_cap = max(sublane, (budget_bytes // (cols * itemsize)) // sublane * sublane)
    if rows <= tm_cap:
        tm = rows          # single full-extent block (toy shapes land here)
    else:
        tm = tm_cap        # multiple of sublane; partial last block is masked
    grid = (pl.cdiv(rows, tm),)

    out2 = pl.pallas_call(
        _copy_kernel,
        out_shape=jax.ShapeDtypeStruct((rows, cols), x.dtype),
        grid_spec=pl.GridSpec(
            grid=grid,
            in_specs=[pl.BlockSpec((tm, cols), lambda i: (i, 0))],
            out_specs=pl.BlockSpec((tm, cols), lambda i: (i, 0)),
        ),
        input_output_aliases={0: 0},
        compiler_params=pltpu.CompilerParams(
            dimension_semantics=("parallel",),
        ),
        cost_estimate=pl.CostEstimate(
            flops=0, transcendentals=0, bytes_accessed=2 * n * itemsize
        ),
    )(x2)
    return out2.reshape(orig_shape)


class Decoder:
    """The base decoder interface for the encoder-decoder architecture.

    Mirrors the PyTorch abstract class.  Subclasses must override
    `init_state` and supply real decoding math; the base `forward` here is
    the identity pass-through implemented as a Pallas kernel so the interface
    can be exercised end-to-end on TPU.
    """

    def __init__(self):
        # No parameters: the PyTorch __init__ defines none.
        pass

    def init_state(self, enc_outputs):
        raise NotImplementedError

    def forward(self, X, state):
        # Abstract in PyTorch (raises NotImplementedError).  Here: route X
        # through the Pallas identity kernel and return (output, state).
        out = _pallas_identity(X)
        return out, state

    def __call__(self, X, state):
        return self.forward(X, state)


if __name__ == "__main__":
    key = jax.random.PRNGKey(0)
    batch, seq, hidden = 2, 8, 32
    k_x, k_s = jax.random.split(key)
    X = jax.random.normal(k_x, (batch, seq, hidden), dtype=jnp.float32)
    # A synthetic "state" (e.g. what init_state would produce from enc outputs).
    state = jax.random.normal(k_s, (batch, hidden), dtype=jnp.float32)

    # Host-side reference copy (the kernel aliases its flattened input buffer).
    X_ref = jax.device_get(X)

    dec = Decoder()
    out, new_state = dec(X, state)
    out = jax.block_until_ready(out)

    assert out.shape == X_ref.shape and out.dtype == X_ref.dtype
    assert bool(jnp.allclose(out, X_ref)), "identity pass-through mismatch"
    assert new_state.shape == (batch, hidden)
    print("KERNEL_OK")
</pallas_src>

<mosaic_0001>
module attributes {stable_mosaic.version = 11 : i64} {
  func.func @_copy_kernel(%arg0: i32, %arg1: memref<4x128xf32, #tpu.memory_space<vmem>>, %arg2: memref<4x128xf32, #tpu.memory_space<vmem>>) attributes {dimension_semantics = [#tpu.dimension_semantics<parallel>], iteration_bounds = array<i64: 1>, scalar_prefetch = 0 : i64, scratch_operands = 0 : i64, tpu.core_type = #tpu.core_type<tc>, window_params = [{transform_indices = @transform_0, window_bounds = array<i64: 4, 128>}, {transform_indices = @transform_1, window_bounds = array<i64: 4, 128>}]} {
    %c0 = arith.constant 0 : index
    %c0_0 = arith.constant 0 : index
    %0 = vector.load %arg1[%c0, %c0_0] : memref<4x128xf32, #tpu.memory_space<vmem>>, vector<4x128xf32>
    %c0_1 = arith.constant 0 : index
    %c0_2 = arith.constant 0 : index
    %1 = vector.load %arg2[%c0_1, %c0_2] : memref<4x128xf32, #tpu.memory_space<vmem>>, vector<4x128xf32>
    tpu.vector_store %arg2[%c0_1, %c0_2], %0 {strides = array<i32>} : memref<4x128xf32, #tpu.memory_space<vmem>>, vector<4x128xf32>,
    return
  }
  func.func @transform_0(%arg0: i32) -> (i32, i32) {
    %c0_i32 = arith.constant 0 : i32
    %c0_i32_0 = arith.constant 0 : i32
    return %arg0, %c0_i32 : i32, i32
  }
  func.func @transform_1(%arg0: i32) -> (i32, i32) {
    %c0_i32 = arith.constant 0 : i32
    %c0_i32_0 = arith.constant 0 : i32
    return %arg0, %c0_i32 : i32, i32
  }
}

</mosaic_0001>

<llo_original>
// kernel: tpu_custom_call.1
$region0: #{tpu_custom_call.1}
  #allocation0 [shape = 'u32[]', space=smem, size = 0x4, offset = 0x4, fixed_abs, tag = 'smem constant byte address 0x4 - core index']
  #allocation1 [shape = 'u32[144,128]{1,0:T(1,128)}', space=vmem, size = 0x12000, scoped, tag = 'internal scratch']
  %s0 = inlined_call_operand.hbm [shape: f32[4,128], index: 0, kind: input, shape index: {}, may-alias: {0,1}]
  %s1 = inlined_call_operand.hbm [shape: f32[4,128], index: 1, kind: output, shape index: {}, may-alias: {0,1}]
  %s2 = sld [smem:[#allocation0]]
  $region18: #{tpu_custom_call.1} parent=0
    _
  %s4 = ssub.s32 1, %s2
  %s5 = scalar_select 0, %s4, %s2
  $region1: #{tpu_custom_call.1} parent=0
    #allocation2 [shape = 'u8[2048]{0}', space=vmem, size = 0x800, scoped, tag = 'input window, operand 0, single buffered']
    #allocation3 [shape = 's32[1]{0}', space=sflag, size = 0x4, scoped, tag = 'scoped memory for tpu_custom_call.1']
    #allocation4 [shape = 's32[1]{0}', space=sflag, size = 0x4, scoped, tag = 'scoped memory for tpu_custom_call.1']
    #allocation5 [shape = 'u8[2048]{0}', space=vmem, size = 0x800, scoped, tag = 'output window, operand 0, single buffered']
    %6 = vsyncpa [#allocation3], 0
    %7 = vsyncpa [#allocation4], 0
    // Predicated region
    $region2: #{tpu_custom_call.1} parent=1 // pred_check
      _
    $region3: #{tpu_custom_call.1} parent=1 // pred_check_branch
      %9 = sbr.rel (0) target = $region5
    $region4: #{tpu_custom_call.1} parent=1 // pred_region
      %s11 = ssub.s32 64, 64
      %12 = vsyncadd [#allocation3], %s11
      %s14 = sshll.u32 [#allocation2], 4
      %s15 = int_to_ptr.vmem [resolvable:$true] %s14
      %17 = dma.hbm_to_vmem [thread:$0]  %s0, 64, %s15, [#allocation3]
    $region5: #{tpu_custom_call.1} parent=1 // pred_fallthru
      _
    // Predicated region
    $region6: #{tpu_custom_call.1} parent=1 // pred_check
      _
    $region7: #{tpu_custom_call.1} parent=1 // pred_check_branch
      %19 = sbr.rel (0) target = $region9
    $region8: #{tpu_custom_call.1} parent=1 // pred_region
      %20 = dma.done [#allocation3], 64
    $region9: #{tpu_custom_call.1} parent=1 // pred_fallthru
      _
    %v21 = vld [vmem:[#allocation2] sm:$0xf]
    %22 = vst [vmem:[#allocation5] sm:$0xf] %v21
    // Predicated region
    $region10: #{tpu_custom_call.1} parent=1 // pred_check
      _
    $region11: #{tpu_custom_call.1} parent=1 // pred_check_branch
      %24 = sbr.rel (0) target = $region13
    $region12: #{tpu_custom_call.1} parent=1 // pred_region
      %s26 = ssub.s32 64, 64
      %27 = vsyncadd [#allocation4], %s26
      %s29 = sshll.u32 [#allocation5], 4
      %s30 = int_to_ptr.vmem [resolvable:$true] %s29
      %32 = dma.vmem_to_hbm [thread:$0]  %s30, 64, %s1, [#allocation4]
    $region13: #{tpu_custom_call.1} parent=1 // pred_fallthru
      _
    // Predicated region
    $region14: #{tpu_custom_call.1} parent=1 // pred_check
      _
    $region15: #{tpu_custom_call.1} parent=1 // pred_check_branch
      %34 = sbr.rel (0) target = $region17
    $region16: #{tpu_custom_call.1} parent=1 // pred_region
      %35 = dma.done [#allocation4], 64
    $region17: #{tpu_custom_call.1} parent=1 // pred_fallthru
      _
    %36 = vsyncpa [#allocation3], 1
    %37 = vsyncpa [#allocation4], 1

</llo_original>
